<compile_context>
chip_gen: v6e
topology: v6e:2x2x1
jax: 0.10.0
libtpu: 0.0.40
codegen_flags: <defaults>
</compile_context>

<pallas_src>
import functools

import jax
import jax.numpy as jnp
from jax.experimental import pallas as pl
from jax.experimental.pallas import tpu as pltpu

ROWS = 8      # sublane-aligned packed-weight tile height
LANES = 128   # lane-aligned tile width


def _softplus(z):
    # numerically stable softplus: max(z,0) + log1p(exp(-|z|)); VPU + EUP only.
    return jnp.maximum(z, 0.0) + jnp.log1p(jnp.exp(-jnp.abs(z)))


# ----------------------------------------------------------------------------
# Weight packing (done ONCE; cached by the caller).
# ----------------------------------------------------------------------------
def pack_weights(W1, W2, W3):
    """(8,128) f32 VMEM tile for the single-sample kernel.

    Layout (all other entries are EXACT ZEROS — required invariant, see header):
      row 0,   lanes 0..2 : W1[:, 0]
      rows 1-3,lanes 0..2 : W2
      rows 4-6,lane 0     : W3[0, :] (as a sublane column)
    """
    packed = jnp.zeros((ROWS, LANES), jnp.float32)
    packed = packed.at[0, 0:3].set(jnp.asarray(W1, jnp.float32)[:, 0])
    packed = packed.at[1:4, 0:3].set(jnp.asarray(W2, jnp.float32))
    packed = packed.at[4:7, 0].set(jnp.asarray(W3, jnp.float32)[0, :])
    return packed


def pack_weight_vector(W1, W2, W3):
    """(15,) f32 vector for the batched kernel (lives in SMEM)."""
    return jnp.concatenate([
        jnp.asarray(W1, jnp.float32).reshape(-1),      # 0..2   : W1[:,0]
        jnp.asarray(W2, jnp.float32).reshape(-1),      # 3..11  : W2 row-major
        jnp.asarray(W3, jnp.float32).reshape(-1),      # 12..14 : W3[0,:]
    ])


# ----------------------------------------------------------------------------
# Single-sample kernel (matches module semantics exactly).
# ----------------------------------------------------------------------------
def simplenet_kernel(x_ref, w_ref, o_ref):
    # x_ref: (1,1) f32 in SMEM; w_ref: (8,128) packed weights in VMEM;
    # o_ref: (1,128) f32 lane-dense output (lane 0 carries the result).
    x = x_ref[0, 0]                                   # scalar from SMEM

    w1_row = w_ref[0:1, :]                            # (1,128): W1 in lanes 0..2
    w2_blk = w_ref[1:4, :]                            # (3,128): W2 rows, zeros elsewhere
    w3_blk = w_ref[4:7, :]                            # (3,128): W3 column in lane 0

    # Layer 1: h1_j = softplus(W1[j,0] * x).  Dead lanes become softplus(0) but
    # are killed by the exact-zero padding of W2 (packing invariant).
    h1 = _softplus(w1_row * x)                        # (1,128)

    # Layer 2: one lane reduction (3,128) -> (3,1), softplus in column form.
    z2 = jnp.sum(w2_blk * h1, axis=1, keepdims=True)  # (3,1)
    h2 = _softplus(z2)                                # (3,1)

    # Layer 3: one sublane reduction; lane 0 holds the result, other lanes 0.
    o_ref[...] = jnp.sum(w3_blk * h2, axis=0, keepdims=True)   # (1,128)


@jax.jit
def simplenet_forward(x, packed_w):
    """x: shape (1,) or scalar; packed_w from pack_weights(). Returns shape (1,)."""
    x2 = jnp.asarray(x, jnp.float32).reshape(1, 1)
    out_tile = pl.pallas_call(
        simplenet_kernel,
        out_shape=jax.ShapeDtypeStruct((1, LANES), jnp.float32),
        in_specs=[pl.BlockSpec(memory_space=pltpu.MemorySpace.SMEM),   # x (1,1)
                  pl.BlockSpec(memory_space=pltpu.MemorySpace.VMEM)],  # weights (8,128)
        out_specs=pl.BlockSpec(memory_space=pltpu.MemorySpace.VMEM),
    )(x2, packed_w)
    return out_tile[0, 0:1]  # shape (1,), matches out.view(-1)


# ----------------------------------------------------------------------------
# Batched kernel: one independent sample per element of a (rows,128) tile.
# Pure elementwise VPU/EUP work — no MXU, no XLU, lane-dense stores.
# ----------------------------------------------------------------------------
def simplenet_batched_kernel(w_ref, x_ref, o_ref):
    # w_ref: (15,) f32 in SMEM; x_ref / o_ref: (block_rows, 128) f32 in VMEM.
    x = x_ref[...]
    h1_0 = _softplus(w_ref[0] * x)
    h1_1 = _softplus(w_ref[1] * x)
    h1_2 = _softplus(w_ref[2] * x)
    h2_0 = _softplus(w_ref[3] * h1_0 + w_ref[4] * h1_1 + w_ref[5] * h1_2)
    h2_1 = _softplus(w_ref[6] * h1_0 + w_ref[7] * h1_1 + w_ref[8] * h1_2)
    h2_2 = _softplus(w_ref[9] * h1_0 + w_ref[10] * h1_1 + w_ref[11] * h1_2)
    o_ref[...] = w_ref[12] * h2_0 + w_ref[13] * h2_1 + w_ref[14] * h2_2


@functools.partial(jax.jit, static_argnames=("block_rows",))
def simplenet_forward_batched(x, wvec, *, block_rows=256):
    """x: shape (B,) scalars; wvec from pack_weight_vector(). Returns shape (B,)."""
    x = jnp.asarray(x, jnp.float32).reshape(-1)
    n = x.shape[0]

    rows = max(8, -(-(-(-n // LANES)) // 8) * 8)        # sublane-aligned row count
    br = max(8, (min(block_rows, rows) // 8) * 8)       # block rows (multiple of 8)
    rows = -(-rows // br) * br                          # pad rows to block multiple
    xp = jnp.pad(x, (0, rows * LANES - n)).reshape(rows, LANES)

    out = pl.pallas_call(
        simplenet_batched_kernel,
        out_shape=jax.ShapeDtypeStruct((rows, LANES), jnp.float32),
        grid=(rows // br,),
        in_specs=[pl.BlockSpec(memory_space=pltpu.MemorySpace.SMEM),   # weights (15,)
                  pl.BlockSpec((br, LANES), lambda i: (i, 0))],        # inputs
        out_specs=pl.BlockSpec((br, LANES), lambda i: (i, 0)),         # lane-dense outputs
        compiler_params=pltpu.CompilerParams(
            dimension_semantics=("parallel",)),   # shards across v7x's 2 TCs
    )(wvec, xp)
    return out.reshape(-1)[:n]


# ----------------------------------------------------------------------------
# Pure-JAX reference.
# ----------------------------------------------------------------------------
def _reference_forward(x, W1, W2, W3):
    x = jnp.asarray(x, jnp.float32).reshape(1, 1)
    sp = jax.nn.softplus
    h1 = sp(W1.astype(jnp.float32) @ x)
    h2 = sp(W2.astype(jnp.float32) @ h1)
    return (W3.astype(jnp.float32) @ h2).reshape(-1)


if __name__ == "__main__":
    key = jax.random.PRNGKey(0)
    k_w1, k_w2, k_w3, k_x, k_xb = jax.random.split(key, 5)

    # Deterministic "randn"-style parameter init (shapes from __init__).
    W1 = jax.random.normal(k_w1, (3, 1), dtype=jnp.float32)
    W2 = jax.random.normal(k_w2, (3, 3), dtype=jnp.float32)
    W3 = jax.random.normal(k_w3, (1, 3), dtype=jnp.float32)

    # Pack weights ONCE (static across calls).
    packed_w = pack_weights(W1, W2, W3)
    wvec = pack_weight_vector(W1, W2, W3)

    # --- single-sample path (exact module semantics: scalar in, (1,) out) ---
    x = jax.random.normal(k_x, (1,), dtype=jnp.float32)
    out = jax.block_until_ready(simplenet_forward(x, packed_w))
    ref = _reference_forward(x, W1, W2, W3)
    assert out.shape == (1,)
    assert jnp.allclose(out, ref, rtol=1e-4, atol=1e-5), (out, ref)

    # --- batched path (throughput): many scalars per call, all elementwise ---
    xb = jax.random.normal(k_xb, (4096,), dtype=jnp.float32)
    outb = jax.block_until_ready(
        simplenet_forward_batched(xb, wvec, block_rows=16))
    refb = jax.vmap(lambda s: _reference_forward(s, W1, W2, W3))(xb).reshape(-1)
    assert outb.shape == (4096,)
    assert jnp.allclose(outb, refb, rtol=1e-4, atol=1e-4), (outb[:4], refb[:4])

    print("KERNEL_OK")
</pallas_src>

<mosaic_0001>
module attributes {stable_mosaic.version = 11 : i64} {
  func.func @simplenet_kernel(%arg0: memref<1x1xf32, #tpu.memory_space<smem>>, %arg1: memref<8x128xf32, #tpu.memory_space<vmem>>, %arg2: memref<1x128xf32, #tpu.memory_space<vmem>>) attributes {dimension_semantics = [], scalar_prefetch = 0 : i64, scratch_operands = 0 : i64, tpu.core_type = #tpu.core_type<tc>} {
    %c0 = arith.constant 0 : index
    %c0_0 = arith.constant 0 : index
    %0 = memref.load %arg0[%c0, %c0_0] : memref<1x1xf32, #tpu.memory_space<smem>>
    %c0_1 = arith.constant 0 : index
    %c0_2 = arith.constant 0 : index
    %1 = vector.load %arg1[%c0_1, %c0_2] : memref<8x128xf32, #tpu.memory_space<vmem>>, vector<1x128xf32>
    %c1 = arith.constant 1 : index
    %c0_3 = arith.constant 0 : index
    %2 = vector.load %arg1[%c1, %c0_3] : memref<8x128xf32, #tpu.memory_space<vmem>>, vector<3x128xf32>
    %c4 = arith.constant 4 : index
    %c0_4 = arith.constant 0 : index
    %3 = vector.load %arg1[%c4, %c0_4] : memref<8x128xf32, #tpu.memory_space<vmem>>, vector<3x128xf32>
    %4 = vector.broadcast %0 : f32 to vector<1x128xf32>
    %5 = arith.mulf %1, %4 : vector<1x128xf32>
    %cst = arith.constant 0.000000e+00 : f32
    %6 = vector.broadcast %cst : f32 to vector<1x128xf32>
    %7 = arith.maximumf %5, %6 : vector<1x128xf32>
    %8 = math.absf %5 : vector<1x128xf32>
    %cst_5 = arith.constant 0.000000e+00 : f32
    %9 = vector.broadcast %cst_5 : f32 to vector<1x128xf32>
    %10 = arith.subf %9, %8 : vector<1x128xf32>
    %11 = math.exp %10 : vector<1x128xf32>
    %12 = math.log1p %11 : vector<1x128xf32>
    %13 = arith.addf %7, %12 : vector<1x128xf32>
    %14 = vector.broadcast %13 : vector<1x128xf32> to vector<3x128xf32>
    %15 = arith.mulf %2, %14 : vector<3x128xf32>
    %cst_6 = arith.constant dense<0.000000e+00> : vector<3xf32>
    %16 = vector.multi_reduction <add>, %15, %cst_6 [1] : vector<3x128xf32> to vector<3xf32>
    %17 = vector.shape_cast %16 : vector<3xf32> to vector<3x1xf32>
    %cst_7 = arith.constant 0.000000e+00 : f32
    %18 = vector.broadcast %cst_7 : f32 to vector<3x1xf32>
    %19 = arith.maximumf %17, %18 : vector<3x1xf32>
    %20 = math.absf %17 : vector<3x1xf32>
    %cst_8 = arith.constant 0.000000e+00 : f32
    %21 = vector.broadcast %cst_8 : f32 to vector<3x1xf32>
    %22 = arith.subf %21, %20 : vector<3x1xf32>
    %23 = math.exp %22 : vector<3x1xf32>
    %24 = math.log1p %23 : vector<3x1xf32>
    %25 = arith.addf %19, %24 : vector<3x1xf32>
    %26 = vector.broadcast %25 : vector<3x1xf32> to vector<3x128xf32>
    %27 = arith.mulf %3, %26 : vector<3x128xf32>
    %cst_9 = arith.constant dense<0.000000e+00> : vector<128xf32>
    %28 = vector.multi_reduction <add>, %27, %cst_9 [0] : vector<3x128xf32> to vector<128xf32>
    %29 = vector.shape_cast %28 : vector<128xf32> to vector<1x128xf32>
    %c0_10 = arith.constant 0 : index
    %c0_11 = arith.constant 0 : index
    %30 = vector.load %arg2[%c0_10, %c0_11] : memref<1x128xf32, #tpu.memory_space<vmem>>, vector<1x128xf32>
    tpu.vector_store %arg2[%c0_10, %c0_11], %29 {strides = array<i32>} : memref<1x128xf32, #tpu.memory_space<vmem>>, vector<1x128xf32>,
    return
  }
}

</mosaic_0001>

<llo_original>
// kernel: simplenet_forward.1
$region0: #{simplenet_forward.1}
  #allocation0 [shape = 'u32[]', space=smem, size = 0x4, offset = 0x4, fixed_abs, tag = 'smem constant byte address 0x4 - core index']
  #allocation1 [shape = 'u32[144,128]{1,0:T(1,128)}', space=vmem, size = 0x12000, scoped, tag = 'internal scratch']
  #allocation2 [shape = 'f32[1,1]{1,0:T(1,128)S(6)}', space=smem, size = 0x200, scoped, tag = 'scoped memory for simplenet_forward.1']
  %s0 = inlined_call_operand.<no memory space> [shape: f32[1,1], index: 0, kind: input, shape index: {}]
  %s1 = inlined_call_operand.hbm [shape: f32[8,128], index: 1, kind: input, shape index: {}]
  %s2 = inlined_call_operand.hbm [shape: f32[1,128], index: 2, kind: output, shape index: {}]
  %s3 = sld [smem:[#allocation0]]
  $region22: #{simplenet_forward.1} parent=0
    _
  %s5 = ssub.s32 1, %s3
  %s6 = scalar_select 0, %s5, %s3
  %7 = sst [smem:[#allocation2]] %s0
  $region1: #{simplenet_forward.1} parent=0
    #allocation3 [shape = 'u8[4096]{0}', space=vmem, size = 0x1000, scoped, tag = 'input window, operand 1, single buffered']
    #allocation4 [shape = 's32[1]{0}', space=sflag, size = 0x4, scoped, tag = 'scoped memory for simplenet_forward.1']
    #allocation5 [shape = 's32[1]{0}', space=sflag, size = 0x4, scoped, tag = 'scoped memory for simplenet_forward.1']
    #allocation6 [shape = 'u8[512]{0}', space=vmem, size = 0x400, scoped, tag = 'output window, operand 0, single buffered']
    %8 = vsyncpa [#allocation4], 0
    %9 = vsyncpa [#allocation5], 0
    // Predicated region
    $region2: #{simplenet_forward.1} parent=1 // pred_check
      _
    $region3: #{simplenet_forward.1} parent=1 // pred_check_branch
      %11 = sbr.rel (0) target = $region5
    $region4: #{simplenet_forward.1} parent=1 // pred_region
      _
    $region5: #{simplenet_forward.1} parent=1 // pred_fallthru
      _
    // Predicated region
    $region6: #{simplenet_forward.1} parent=1 // pred_check
      _
    $region7: #{simplenet_forward.1} parent=1 // pred_check_branch
      %13 = sbr.rel (0) target = $region9
    $region8: #{simplenet_forward.1} parent=1 // pred_region
      %s15 = ssub.s32 128, 128
      %16 = vsyncadd [#allocation4], %s15
      %s18 = sshll.u32 [#allocation3], 4
      %s19 = int_to_ptr.vmem [resolvable:$true] %s18
      %21 = dma.hbm_to_vmem [thread:$0]  %s1, 128, %s19, [#allocation4]
    $region9: #{simplenet_forward.1} parent=1 // pred_fallthru
      _
    // Predicated region
    $region10: #{simplenet_forward.1} parent=1 // pred_check
      _
    $region11: #{simplenet_forward.1} parent=1 // pred_check_branch
      %23 = sbr.rel (0) target = $region13
    $region12: #{simplenet_forward.1} parent=1 // pred_region
      %24 = dma.done [#allocation4], 128
    $region13: #{simplenet_forward.1} parent=1 // pred_fallthru
      _
    %s25 = sld [smem:[#allocation2]]
    %v26 = vld [vmem:[#allocation3] sm:$0x1]
    %v27 = vld [vmem:[#allocation3 + $0x1] sm:$0x7]
    %v28 = vld [vmem:[#allocation3 + $0x4] sm:$0x7]
    %v29 = vstv %s25
    %v30 = vmul.f32 %v26, %v29
    %v31 = vmax.f32 %v30, 0.0
    %v32 = vand.u32 2147483647, %v30
    %v33 = vsub.f32 0.0, %v32
    %v34 = vmul.f32 %v33, 1.442695
    %v35 = vpow.pop %v34
    %v36 = vadd.f32 %v35, 1.0
    %v37 = vlog2.pop %v36
    %v38 = vmul.f32 %v37, 0.6931472
    %v39 = vmul.f32 -0.5, %v35
    %v40 = vadd.f32 %v39, 1.0
    %v41 = vmul.f32 %v40, %v35
    %v42 = vand.u32 2147483647, %v35
    %vm43 = vcmp.lt.f32.partialorder %v42, 0.0004427343
    %v44 = vsel %vm43, %v41, %v38
    %v45 = vadd.f32 %v31, %v44
    %v46 = vlaneseq
    %v47 = vshrl.u32 %v46, 7
    %v48 = vsub.s32 0, %v47
    %v49 = vrot.slane %v45, %v48
    %v50 = vmul.f32 %v27, %v49
    %vm51 = vcmask 1042432
    %v52 = vsel %vm51, %v50, 0.0
    %53 = vadd.xlane.f32.xlu0 %v52
    %v54 = vpop.xlane.xlu0 %53
    %v55 = vmax.f32 %v54, 0.0
    %v56 = vand.u32 2147483647, %v54
    %v57 = vsub.f32 0.0, %v56
    %v58 = vmul.f32 %v57, 1.442695
    %v59 = vpow.pop %v58
    %v60 = vadd.f32 %v59, 1.0
    %v61 = vlog2.pop %v60
    %v62 = vmul.f32 %v61, 0.6931472
    %v63 = vmul.f32 -0.5, %v59
    %v64 = vadd.f32 %v63, 1.0
    %v65 = vmul.f32 %v64, %v59
    %v66 = vand.u32 2147483647, %v59
    %vm67 = vcmp.lt.f32.partialorder %v66, 0.0004427343
    %v68 = vsel %vm67, %v65, %v62
    %v69 = vadd.f32 %v55, %v68
    %v70 = vmul.f32 %v28, %v69
    %v71 = vsel %vm51, %v70, 0.0
    %v72 = vrot.slane %v71, 4
    %v73 = vadd.f32 %v71, %v72
    %v74 = vrot.slane %v73, 2
    %v75 = vadd.f32 %v73, %v74
    %v76 = vrot.slane %v75, 1
    %v77 = vadd.f32 %v75, %v76
    %78 = vst [vmem:[#allocation6] sm:$0x1] %v77
    // Predicated region
    $region14: #{simplenet_forward.1} parent=1 // pred_check
      _
    $region15: #{simplenet_forward.1} parent=1 // pred_check_branch
      %80 = sbr.rel (0) target = $region17
    $region16: #{simplenet_forward.1} parent=1 // pred_region
      %s82 = ssub.s32 16, 16
      %83 = vsyncadd [#allocation5], %s82
      %s85 = sshll.u32 [#allocation6], 4
      %s86 = int_to_ptr.vmem [resolvable:$true] %s85
      %88 = dma.vmem_to_hbm [thread:$0]  %s86, 16, %s2, [#allocation5]
    $region17: #{simplenet_forward.1} parent=1 // pred_fallthru
      _
    // Predicated region
    $region18: #{simplenet_forward.1} parent=1 // pred_check
      _
    $region19: #{simplenet_forward.1} parent=1 // pred_check_branch
      %90 = sbr.rel (0) target = $region21
    $region20: #{simplenet_forward.1} parent=1 // pred_region
      %91 = dma.done [#allocation5], 16
    $region21: #{simplenet_forward.1} parent=1 // pred_fallthru
      _
    %92 = vsyncpa [#allocation4], 1
    %93 = vsyncpa [#allocation5], 1

</llo_original>
